<compile_context>
chip_gen: v6e
topology: v6e:2x2x1
jax: 0.10.0
libtpu: 0.0.40
codegen_flags: <defaults>
</compile_context>

<pallas_src>
import functools

import jax
import jax.numpy as jnp
from jax.experimental import pallas as pl
from jax.experimental.pallas import tpu as pltpu

# Below this channel count an unrolled VPU multiply-add beats an MXU pass.
_MIN_MXU_CHANNELS = 16


def _salhead_kernel(b_ref, w_smem_ref, w_vmem_ref, x_ref, o_ref, *, use_mxu):
    # b_ref:      (1,)      f32 SMEM        bias
    # w_smem_ref: (C,)      f32 SMEM        weights for the small-C VPU path
    # w_vmem_ref: (1, C)    VMEM (x dtype)  weights for the MXU path
    # x_ref:      (1, C, T) VMEM            lane-dense input slab
    # o_ref:      (1, 1, T) VMEM            lane-dense output slab
    x = x_ref[0]                                             # (C, T)
    if use_mxu:
        # Channel contraction on the MXU with f32 accumulation (vex slot;
        # VPU stays idle so the kernel remains pure DMA-bound).
        acc = jnp.dot(w_vmem_ref[...], x, preferred_element_type=jnp.float32)
    else:
        # Tiny C: unrolled VPU multiply-add.  Multiplying the native-dtype row
        # by an f32 SMEM scalar promotes to f32, so accumulation stays f32
        # without materializing an f32 copy of the whole block.
        C = x.shape[0]
        acc = x[0:1, :] * w_smem_ref[0]
        for c in range(1, C):
            acc = acc + x[c:c + 1, :] * w_smem_ref[c]
    acc = acc + b_ref[0]                                     # (1, T) f32
    o_ref[...] = jax.nn.sigmoid(acc)[None, :, :].astype(o_ref.dtype)


def _round_down(v, m):
    return (v // m) * m


def _round_up(v, m):
    return ((v + m - 1) // m) * m


def _vmem_capacity_bytes():
    try:
        return int(pltpu.get_tpu_info().vmem_capacity_bytes)
    except Exception:
        return 64 * 1024 * 1024            # conservative (v7x per-core) fallback


@functools.partial(jax.jit, static_argnames=("block_bytes",))
def salhead_forward(x_nchw, weight, bias, *, block_bytes=None):
    """SalHead forward: x (N, C, H, W) -> sigmoid(conv1x1(x)) of shape (N, 1, H, W)."""
    N, C, H, W = x_nchw.shape
    P = H * W
    itemsize = x_nchw.dtype.itemsize

    vmem_cap = _vmem_capacity_bytes()
    if block_bytes is None:
        # ~6 MiB blocks on 64 MiB-VMEM parts (v7x), ~12 MiB on 128 MiB parts.
        block_bytes = (6 if vmem_cap <= 64 * 1024 * 1024 else 12) * 1024 * 1024

    # Free view: put all pixels on the (lane-dense) minor axis.
    x_flat = x_nchw.reshape(N, C, P)

    # Pixels per block: 128-lane aligned, sized for ~block_bytes of input.
    tpix = max(128, _round_down(block_bytes // max(1, C * itemsize), 128))
    if tpix >= P:
        tpix = P                                    # single full-width block
    # Keep >= 4 grid steps when possible so both v7x TensorCores get work.
    while N * pl.cdiv(P, tpix) < 4 and tpix > 128:
        tpix = max(128, _round_up(tpix // 2, 128))

    grid = (N, pl.cdiv(P, tpix))
    use_mxu = C >= _MIN_MXU_CHANNELS

    w_smem = weight.reshape(C).astype(jnp.float32)           # (C,)   f32, SMEM
    w_vmem = weight.reshape(1, C).astype(x_nchw.dtype)       # (1, C) MXU operand
    b_1d = bias.reshape(1).astype(jnp.float32)

    # VMEM budget from the actual double-buffered blocks (+ headroom), clamped
    # to this generation's capacity -- no hardcoded 32 MiB assumption.
    in_blk = C * tpix * itemsize
    out_blk = tpix * itemsize
    vmem_limit = 2 * (in_blk + out_blk) + 2 * C * itemsize + 4 * 1024 * 1024
    vmem_limit = int(min(max(vmem_limit, 16 * 1024 * 1024), vmem_cap))

    out_flat = pl.pallas_call(
        functools.partial(_salhead_kernel, use_mxu=use_mxu),
        out_shape=jax.ShapeDtypeStruct((N, 1, P), x_nchw.dtype),
        grid_spec=pltpu.PrefetchScalarGridSpec(
            num_scalar_prefetch=0,
            grid=grid,
            in_specs=[
                pl.BlockSpec(memory_space=pltpu.MemorySpace.SMEM),    # bias (1,)
                pl.BlockSpec(memory_space=pltpu.MemorySpace.SMEM),    # weight (C,)
                pl.BlockSpec((1, C), lambda n, t: (0, 0)),            # weight (1, C)
                pl.BlockSpec((1, C, tpix), lambda n, t: (n, 0, t)),   # x slab
            ],
            out_specs=pl.BlockSpec((1, 1, tpix), lambda n, t: (n, 0, t)),
        ),
        compiler_params=pltpu.CompilerParams(
            dimension_semantics=("parallel", "parallel"),
            vmem_limit_bytes=vmem_limit,
        ),
        cost_estimate=pl.CostEstimate(
            flops=2 * N * C * P,
            transcendentals=N * P,
            bytes_accessed=N * C * P * itemsize + N * P * itemsize,
        ),
    )(b_1d, w_smem, w_vmem, x_flat)

    return out_flat.reshape(N, 1, H, W)


def _reference(x_nchw, weight, bias):
    # Pure-JAX reference of the PyTorch forward: Conv2d(C, 1, 1) + Sigmoid.
    w = weight.reshape(1, -1).astype(jnp.float32)             # (1, C)
    y = jnp.einsum("oc,nchw->nohw", w, x_nchw.astype(jnp.float32))
    y = y + bias.reshape(1, 1, 1, 1)
    return jax.nn.sigmoid(y).astype(x_nchw.dtype)


if __name__ == "__main__":
    key = jax.random.PRNGKey(0)
    kx, kw, kb, kx2, kx3, kw3 = jax.random.split(key, 6)

    # Shapes from nn.Conv2d(in_channel, 1, 1): weight (1, C, 1, 1), bias (1,).
    N, C, H, W = 2, 4, 16, 16
    x = jax.random.normal(kx, (N, C, H, W), dtype=jnp.float32)
    weight = jax.random.normal(kw, (1, C, 1, 1), dtype=jnp.float32) * 0.1
    bias = jax.random.normal(kb, (1,), dtype=jnp.float32) * 0.1

    out = jax.block_until_ready(salhead_forward(x, weight, bias))
    ref = _reference(x, weight, bias)
    assert out.shape == (N, 1, H, W), out.shape
    assert jnp.allclose(out, ref, atol=1e-5, rtol=1e-5), "mismatch vs reference"

    # Multi-tile + ragged-last-block path (H*W = 320 is not a multiple of the
    # 128-aligned pixel tile) with a deliberately tiny block budget.
    x2 = jax.random.normal(kx2, (1, C, 20, 16), dtype=jnp.float32)
    out2 = jax.block_until_ready(
        salhead_forward(x2, weight, bias, block_bytes=16 * 1024))
    ref2 = _reference(x2, weight, bias)
    assert out2.shape == (1, 1, 20, 16), out2.shape
    assert jnp.allclose(out2, ref2, atol=1e-5, rtol=1e-5), "mismatch (ragged tiles)"

    # Wider head exercises the MXU channel-reduction path (C >= 16).  MXU f32
    # accumulation order differs from the einsum reference, so allow a looser
    # (but still tight for a sigmoid in [0, 1]) absolute tolerance.
    C3 = 32
    x3 = jax.random.normal(kx3, (1, C3, 16, 16), dtype=jnp.float32)
    w3 = jax.random.normal(kw3, (1, C3, 1, 1), dtype=jnp.float32) * 0.1
    out3 = jax.block_until_ready(salhead_forward(x3, w3, bias))
    ref3 = _reference(x3, w3, bias)
    assert out3.shape == (1, 1, 16, 16), out3.shape
    assert jnp.allclose(out3, ref3, atol=2e-3, rtol=0), "mismatch (MXU path)"

    print("KERNEL_OK")
</pallas_src>

<mosaic_0001>
module attributes {stable_mosaic.version = 11 : i64} {
  func.func @_salhead_kernel(%arg0: i32, %arg1: i32, %arg2: memref<1xf32, #tpu.memory_space<smem>>, %arg3: memref<4xf32, #tpu.memory_space<smem>>, %arg4: memref<1x4xf32, #tpu.memory_space<vmem>>, %arg5: memref<1x4x128xf32, #tpu.memory_space<vmem>>, %arg6: memref<1x1x128xf32, #tpu.memory_space<vmem>>) attributes {dimension_semantics = [#tpu.dimension_semantics<parallel>, #tpu.dimension_semantics<parallel>], iteration_bounds = array<i64: 2, 2>, scalar_prefetch = 0 : i64, scratch_operands = 0 : i64, tpu.core_type = #tpu.core_type<tc>, window_params = [{transform_indices = @transform_0, window_bounds = array<i64: 1>}, {transform_indices = @transform_1, window_bounds = array<i64: 4>}, {pipeline_mode = #tpu.pipeline_mode<synchronous>, transform_indices = @transform_2, window_bounds = array<i64: 1, 4>}, {transform_indices = @transform_3, window_bounds = array<i64: 1, 4, 128>}, {transform_indices = @transform_4, window_bounds = array<i64: 1, 1, 128>}]} {
    %c0 = arith.constant 0 : index
    %c0_0 = arith.constant 0 : index
    %c0_1 = arith.constant 0 : index
    %0 = vector.load %arg5[%c0, %c0_0, %c0_1] : memref<1x4x128xf32, #tpu.memory_space<vmem>>, vector<1x4x128xf32>
    %1 = vector.shape_cast %0 : vector<1x4x128xf32> to vector<4x128xf32>
    %2 = vector.extract_strided_slice %1 {offsets = [0, 0], sizes = [1, 128], strides = [1, 1]} : vector<4x128xf32> to vector<1x128xf32>
    %c0_2 = arith.constant 0 : index
    %3 = memref.load %arg3[%c0_2] : memref<4xf32, #tpu.memory_space<smem>>
    %4 = vector.broadcast %3 : f32 to vector<1x128xf32>
    %5 = arith.mulf %2, %4 : vector<1x128xf32>
    %6 = vector.extract_strided_slice %1 {offsets = [1, 0], sizes = [1, 128], strides = [1, 1]} : vector<4x128xf32> to vector<1x128xf32>
    %c1 = arith.constant 1 : index
    %7 = memref.load %arg3[%c1] : memref<4xf32, #tpu.memory_space<smem>>
    %8 = vector.broadcast %7 : f32 to vector<1x128xf32>
    %9 = arith.mulf %6, %8 : vector<1x128xf32>
    %10 = arith.addf %5, %9 : vector<1x128xf32>
    %11 = vector.extract_strided_slice %1 {offsets = [2, 0], sizes = [1, 128], strides = [1, 1]} : vector<4x128xf32> to vector<1x128xf32>
    %c2 = arith.constant 2 : index
    %12 = memref.load %arg3[%c2] : memref<4xf32, #tpu.memory_space<smem>>
    %13 = vector.broadcast %12 : f32 to vector<1x128xf32>
    %14 = arith.mulf %11, %13 : vector<1x128xf32>
    %15 = arith.addf %10, %14 : vector<1x128xf32>
    %16 = vector.extract_strided_slice %1 {offsets = [3, 0], sizes = [1, 128], strides = [1, 1]} : vector<4x128xf32> to vector<1x128xf32>
    %c3 = arith.constant 3 : index
    %17 = memref.load %arg3[%c3] : memref<4xf32, #tpu.memory_space<smem>>
    %18 = vector.broadcast %17 : f32 to vector<1x128xf32>
    %19 = arith.mulf %16, %18 : vector<1x128xf32>
    %20 = arith.addf %15, %19 : vector<1x128xf32>
    %c0_3 = arith.constant 0 : index
    %21 = memref.load %arg2[%c0_3] : memref<1xf32, #tpu.memory_space<smem>>
    %22 = vector.broadcast %21 : f32 to vector<1x128xf32>
    %23 = arith.addf %20, %22 : vector<1x128xf32>
    %24 = arith.negf %23 : vector<1x128xf32>
    %25 = math.exp %24 : vector<1x128xf32>
    %cst = arith.constant 1.000000e+00 : f32
    %26 = vector.broadcast %cst : f32 to vector<1x128xf32>
    %27 = arith.addf %26, %25 : vector<1x128xf32>
    %28 = arith.divf %26, %27 : vector<1x128xf32>
    %29 = vector.shape_cast %28 : vector<1x128xf32> to vector<1x1x128xf32>
    %c0_4 = arith.constant 0 : index
    %c0_5 = arith.constant 0 : index
    %c0_6 = arith.constant 0 : index
    %30 = vector.load %arg6[%c0_4, %c0_5, %c0_6] : memref<1x1x128xf32, #tpu.memory_space<vmem>>, vector<1x1x128xf32>
    tpu.vector_store %arg6[%c0_4, %c0_5, %c0_6], %29 {strides = array<i32>} : memref<1x1x128xf32, #tpu.memory_space<vmem>>, vector<1x1x128xf32>,
    return
  }
  func.func @transform_0(%arg0: i32, %arg1: i32) -> i32 {
    %c0_i32 = arith.constant 0 : i32
    %c0_i32_0 = arith.constant 0 : i32
    return %c0_i32 : i32
  }
  func.func @transform_1(%arg0: i32, %arg1: i32) -> i32 {
    %c0_i32 = arith.constant 0 : i32
    %c0_i32_0 = arith.constant 0 : i32
    return %c0_i32 : i32
  }
  func.func @transform_2(%arg0: i32, %arg1: i32) -> (i32, i32) {
    %c0_i32 = arith.constant 0 : i32
    %c0_i32_0 = arith.constant 0 : i32
    %c0_i32_1 = arith.constant 0 : i32
    return %c0_i32, %c0_i32_0 : i32, i32
  }
  func.func @transform_3(%arg0: i32, %arg1: i32) -> (i32, i32, i32) {
    %c0_i32 = arith.constant 0 : i32
    %c0_i32_0 = arith.constant 0 : i32
    return %arg0, %c0_i32, %arg1 : i32, i32, i32
  }
  func.func @transform_4(%arg0: i32, %arg1: i32) -> (i32, i32, i32) {
    %c0_i32 = arith.constant 0 : i32
    %c0_i32_0 = arith.constant 0 : i32
    return %arg0, %c0_i32, %arg1 : i32, i32, i32
  }
}

</mosaic_0001>

<llo_original>
// kernel: salhead_forward.1
$region0: #{salhead_forward.1}
  #allocation0 [shape = 'u32[]', space=smem, size = 0x4, offset = 0x4, fixed_abs, tag = 'smem constant byte address 0x4 - core index']
  #allocation1 [shape = 'u32[144,128]{1,0:T(1,128)}', space=vmem, size = 0x12000, scoped, tag = 'internal scratch']
  #allocation2 [shape = 'f32[1]{0:T(128)S(6)}', space=smem, size = 0x200, scoped, tag = 'scoped memory for salhead_forward.1']
  %s0 = inlined_call_operand.<no memory space> [shape: f32[1], index: 0, kind: input, shape index: {}]
  %s1 = inlined_call_operand.vmem [shape: f32[4], index: 1, kind: input, shape index: {}, may-alias: {1,2}]
  %s2 = inlined_call_operand.vmem [shape: f32[1,4], index: 2, kind: input, shape index: {}, may-alias: {1,2}]
  %s3 = inlined_call_operand.vmem [shape: f32[2,4,256], index: 3, kind: input, shape index: {}]
  %s4 = inlined_call_operand.vmem [shape: f32[2,1,256], index: 4, kind: output, shape index: {}]
  %s5 = sld [smem:[#allocation0]]
  $region53: #{salhead_forward.1} parent=0
    _
  %s7 = ssub.s32 1, %s5
  %s8 = scalar_select 0, %s7, %s5
  %9 = sst [smem:[#allocation2]] %s0
  $region1: #{salhead_forward.1} parent=0
    #allocation3 [shape = 'u8[512]{0}', space=smem, size = 0x200, scoped, tag = 'input window, operand 1, single buffered']
    #allocation4 [shape = 's32[2]{0}', space=sflag, size = 0x8, scoped, tag = 'scoped memory for salhead_forward.1']
    %10 = vsyncpa [#allocation4], 0
    loop: start=0, step=1, limit=6
    $region2: #{salhead_forward.1} parent=1 // loop_pre_header
      _
    $region3: #{salhead_forward.1} parent=1 // loop_header
      %s12 = sphi 0, %s16
      %p13 = scmp.ge.s32.totalorder %s12, 6
      %s19 = sphi 0, %s31
      %s20 = sphi 0, %s27
      %s21 = sphi 0, %s19
      %s22 = sphi 0, %s20
      %s23 = sphi 0, %s21
      %s24 = sphi 0, %s22
      %s32 = sphi 0, %s32
      %s34 = sphi 0, %s32
      %s35 = sphi 0, %s34
      %s49 = sphi 0, %s35
      %s53 = sphi 0, %s53
      %s55 = sphi 0, %s53
      %s56 = sphi 0, %s55
      %s70 = sphi 0, %s56
      %s74 = sphi 0, %s74
      %s76 = sphi 0, %s74
      %s77 = sphi 0, %s76
      %s91 = sphi 0, %s77
      %s99 = sphi 0, %s101
      %s102 = sphi 0, %s99
      %s103 = sphi 0, %s102
      %s119 = sphi 0, %s103
      %s127 = sphi 0, %s129
      %s130 = sphi 0, %s127
      %s131 = sphi 0, %s130
      %s147 = sphi 0, %s131
    $region4: #{salhead_forward.1} parent=1 // loop_header_branch
      %15 = sbr.rel (%p13) target = $region8
    $region5: #{salhead_forward.1} parent=1 // loop_body
      %s17 = ssub.s32 %s12, 1
      %s18 = ssub.s32 %s12, 2
      %s25 = sadd.s32 1, %s20
      %p26 = scmp.ge.s32.totalorder %s25, 2
      %s27 = scalar_select %p26, 0, %s25
      %s28 = sadd.s32 1, %s19
      %s29 = scalar_select %p26, %s28, %s19
      %p30 = scmp.ge.s32.totalorder %s29, 2
      %s31 = scalar_select %p30, 0, %s29
      %s33 = sadd.s32 %s32, 1
      %p36 = scmp.eq.s32.totalorder %s12, 3
      %p37 = scmp.ne.s32.totalorder %s32, %s34
      %p38 = scmp.eq.s32.totalorder %s12, 0
      %p39 = por %p37, %p38
      %p40 = scmp.ne.s32.totalorder %s32, %s34
      %p41 = scmp.eq.s32.totalorder %s17, 3
      %p42 = por %p40, %p41
      %p43 = scmp.ne.s32.totalorder %s34, %s35
      %p44 = scmp.eq.s32.totalorder %s17, 0
      %p45 = por %p43, %p44
      %p46 = scmp.ne.s32.totalorder %s34, %s35
      %p47 = scmp.eq.s32.totalorder %s18, 3
      %p48 = por %p46, %p47
      %p50 = scmp.ne.s32.totalorder %s35, %s49
      %p51 = scmp.eq.s32.totalorder %s18, 0
      %p52 = por %p50, %p51
      %s54 = sadd.s32 %s53, 1
      %p57 = scmp.eq.s32.totalorder %s12, 3
      %p58 = scmp.ne.s32.totalorder %s53, %s55
      %p59 = scmp.eq.s32.totalorder %s12, 0
      %p60 = por %p58, %p59
      %p61 = scmp.ne.s32.totalorder %s53, %s55
      %p62 = scmp.eq.s32.totalorder %s17, 3
      %p63 = por %p61, %p62
      %p64 = scmp.ne.s32.totalorder %s55, %s56
      %p65 = scmp.eq.s32.totalorder %s17, 0
      %p66 = por %p64, %p65
      %p67 = scmp.ne.s32.totalorder %s55, %s56
      %p68 = scmp.eq.s32.totalorder %s18, 3
      %p69 = por %p67, %p68
      %p71 = scmp.ne.s32.totalorder %s56, %s70
      %p72 = scmp.eq.s32.totalorder %s18, 0
      %p73 = por %p71, %p72
      %s75 = sadd.s32 %s74, 1
      %p78 = scmp.eq.s32.totalorder %s12, 3
      %p79 = scmp.ne.s32.totalorder %s74, %s76
      %p80 = scmp.eq.s32.totalorder %s12, 0
      %p81 = por %p79, %p80
      %p82 = scmp.ne.s32.totalorder %s74, %s76
      %p83 = scmp.eq.s32.totalorder %s17, 3
      %p84 = por %p82, %p83
      %p85 = scmp.ne.s32.totalorder %s76, %s77
      %p86 = scmp.eq.s32.totalorder %s17, 0
      %p87 = por %p85, %p86
      %p88 = scmp.ne.s32.totalorder %s76, %s77
      %p89 = scmp.eq.s32.totalorder %s18, 3
      %p90 = por %p88, %p89
      %p92 = scmp.ne.s32.totalorder %s77, %s91
      %p93 = scmp.eq.s32.totalorder %s18, 0
      %p94 = por %p92, %p93
      %s95 = ssub.s32 %s19, %s31
      %s96 = ssub.s32 %s20, %s27
      %s97 = sor.u32 %s95, %s96
      %p98 = scmp.eq.s32.totalorder %s97, 0
      %s100 = sadd.s32 %s99, 1
      %s101 = scalar_select %p98, %s99, %s100
      %p104 = pneg %p98
      %p105 = scmp.eq.s32.totalorder %s12, 3
      %p106 = por %p104, %p105
      %p107 = scmp.ne.s32.totalorder %s99, %s102
      %p108 = scmp.eq.s32.totalorder %s12, 0
      %p109 = por %p107, %p108
      %p110 = scmp.ne.s32.totalorder %s99, %s102
      %p111 = scmp.eq.s32.totalorder %s17, 3
      %p112 = por %p110, %p111
      %p113 = scmp.ne.s32.totalorder %s102, %s103
      %p114 = scmp.eq.s32.totalorder %s17, 0
      %p115 = por %p113, %p114
      %p116 = scmp.ne.s32.totalorder %s102, %s103
      %p117 = scmp.eq.s32.totalorder %s18, 3
      %p118 = por %p116, %p117
      %p120 = scmp.ne.s32.totalorder %s103, %s119
      %p121 = scmp.eq.s32.totalorder %s18, 0
      %p122 = por %p120, %p121
      %s123 = ssub.s32 %s19, %s31
      %s124 = ssub.s32 %s20, %s27
      %s125 = sor.u32 %s123, %s124
      %p126 = scmp.eq.s32.totalorder %s125, 0
      %s128 = sadd.s32 %s127, 1
      %s129 = scalar_select %p126, %s127, %s128
      %p132 = pneg %p126
      %p133 = scmp.eq.s32.totalorder %s12, 3
      %p134 = por %p132, %p133
      %p135 = scmp.ne.s32.totalorder %s127, %s130
      %p136 = scmp.eq.s32.totalorder %s12, 0
      %p137 = por %p135, %p136
      %p138 = scmp.ne.s32.totalorder %s127, %s130
      %p139 = scmp.eq.s32.totalorder %s17, 3
      %p140 = por %p138, %p139
      %p141 = scmp.ne.s32.totalorder %s130, %s131
      %p142 = scmp.eq.s32.totalorder %s17, 0
      %p143 = por %p141, %p142
      %p144 = scmp.ne.s32.totalorder %s130, %s131
      %p145 = scmp.eq.s32.totalorder %s18, 3
      %p146 = por %p144, %p145
      %p148 = scmp.ne.s32.totalorder %s131, %s147
      %p149 = scmp.eq.s32.totalorder %s18, 0
      %p150 = por %p148, %p149
      %p151 = scmp.le.s32.totalorder 1, %s12
      %p152 = scmp.lt.s32.totalorder %s12, 5
      %p153 = pnand %p151, %p152
      %p154 = pneg %p153
      // Predicated region
      $region9: #{salhead_forward.1} parent=5 // pred_check
        _
      $region10: #{salhead_forward.1} parent=5 // pred_check_branch
        %156 = sbr.rel (%p153) target = $region12
      $region11: #{salhead_forward.1} parent=5 // pred_region
        %s157 = ssub.s32 %s12, 1
        // Predicated region
        $region13: #{salhead_forward.1} parent=11 // pred_check
          %p158 = pneg %p45
        $region14: #{salhead_forward.1} parent=11 // pred_check_branch
          %160 = sbr.rel (%p158) target = $region16
        $region15: #{salhead_forward.1} parent=11 // pred_region
          _
        $region16: #{salhead_forward.1} parent=11 // pred_fallthru
          _
        // Predicated region
        $region17: #{salhead_forward.1} parent=11 // pred_check
          %p161 = pneg %p66
        $region18: #{salhead_forward.1} parent=11 // pred_check_branch
          %163 = sbr.rel (%p161) target = $region20
        $region19: #{salhead_forward.1} parent=11 // pred_region
          %s165 = ssub.s32 16, 16
          %166 = vsyncadd [#allocation4], %s165
          %s168 = sshll.u32 %s1, 4
          %s169 = int_to_ptr.vmem [resolvable:$true] %s168
          %171 = dma.vmem_to_smem %s169, 16, [#allocation3], [#allocation4]
        $region20: #{salhead_forward.1} parent=11 // pred_fallthru
          _
        // Predicated region
        $region21: #{salhead_forward.1} parent=11 // pred_check
          %p172 = pneg %p87
        $region22: #{salhead_forward.1} parent=11 // pred_check_branch
          %174 = sbr.rel (%p172) target = $region24
        $region23: #{salhead_forward.1} parent=11 // pred_region
          _
        $region24: #{salhead_forward.1} parent=11 // pred_fallthru
          _
      $region12: #{salhead_forward.1} parent=5 // pred_fallthru
        _
      %p175 = scmp.lt.s32.totalorder %s12, 4
      // Predicated region
      $region25: #{salhead_forward.1} parent=5 // pred_check
        %p176 = pneg %p175
      $region26: #{salhead_forward.1} parent=5 // pred_check_branch
        %178 = sbr.rel (%p176) target = $region28
      $region27: #{salhead_forward.1} parent=5 // pred_region
        // Predicated region
        $region29: #{salhead_forward.1} parent=27 // pred_check
          %p179 = pneg %p109
        $region30: #{salhead_forward.1} parent=27 // pred_check_branch
          %181 = sbr.rel (%p179) target = $region32
        $region31: #{salhead_forward.1} parent=27 // pred_region
          %p182 = scmp.lt.s32.totalorder %s19, 1
          %s183 = scalar_select %p182, %s19, 1
          %p184 = scmp.lt.s32.totalorder %s20, 1
          %s185 = scalar_select %p184, %s20, 1
          %s186 = smul.addr %s183, 2
          %s187 = sadd.s32 %s185, %s186
          %s188 = smul.addr %s187, 4
          %s189 = scalar_lea.vmem %s3, %s188
        $region32: #{salhead_forward.1} parent=27 // pred_fallthru
          _
      $region28: #{salhead_forward.1} parent=5 // pred_fallthru
        _
      %p190 = scmp.le.s32.totalorder 1, %s12
      %p191 = scmp.lt.s32.totalorder %s12, 5
      %p192 = pnand %p190, %p191
      %p193 = pneg %p192
      // Predicated region
      $region33: #{salhead_forward.1} parent=5 // pred_check
        _
      $region34: #{salhead_forward.1} parent=5 // pred_check_branch
        %195 = sbr.rel (%p192) target = $region36
      $region35: #{salhead_forward.1} parent=5 // pred_region
        %s196 = ssub.s32 %s12, 1
        // Predicated region
        $region37: #{salhead_forward.1} parent=35 // pred_check
          %p197 = pneg %p66
        $region38: #{salhead_forward.1} parent=35 // pred_check_branch
          %199 = sbr.rel (%p197) target = $region40
        $region39: #{salhead_forward.1} parent=35 // pred_region
          %200 = dma.done [#allocation4], 16
        $region40: #{salhead_forward.1} parent=35 // pred_fallthru
          _
        %201 = sfence
        %p202 = pneg %p45
        %p203 = pneg %p42
        %p204 = pneg %p66
        %p205 = pneg %p63
        %p206 = pneg %p87
        %p207 = pneg %p84
        %p208 = scmp.lt.s32.totalorder %s21, 1
        %s209 = scalar_select %p208, %s21, 1
        %p210 = scmp.lt.s32.totalorder %s22, 1
        %s211 = scalar_select %p210, %s22, 1
        %s212 = smul.addr %s209, 2
        %s213 = sadd.s32 %s211, %s212
        %s214 = smul.addr %s213, 4
        %s215 = scalar_lea.vmem %s3, %s214
        %p216 = pneg %p115
        %p217 = pneg %p112
        %p218 = pneg %p143
        %p219 = pneg %p140
        %p220 = scmp.lt.s32.totalorder %s21, 1
        %s221 = scalar_select %p220, %s21, 1
        %p222 = scmp.lt.s32.totalorder %s22, 1
        %s223 = scalar_select %p222, %s22, 1
        %s224 = smul.addr %s221, 2
        %s225 = sadd.s32 %s223, %s224
        %s226 = scalar_lea.vmem %s4, %s225
        %p227 = scmp.lt.s32.totalorder %s21, 1
        %s228 = scalar_select %p227, %s21, 1
        %p229 = scmp.lt.s32.totalorder %s22, 1
        %s230 = scalar_select %p229, %s22, 1
        %s231 = smul.addr %s228, 2
        %s232 = sadd.s32 %s230, %s231
        %s233 = smul.addr %s232, 4
        %s234 = scalar_lea.vmem %s3, %s233
        %p235 = scmp.lt.s32.totalorder %s21, 1
        %s236 = scalar_select %p235, %s21, 1
        %p237 = scmp.lt.s32.totalorder %s22, 1
        %s238 = scalar_select %p237, %s22, 1
        %s239 = smul.addr %s236, 2
        %s240 = sadd.s32 %s238, %s239
        %s241 = scalar_lea.vmem %s4, %s240
        %v242 = vld [vmem:[%s234] sm:$0xf]
        %s243 = sld [smem:[#allocation3]]
        %v244 = vstv %s243
        %v245 = vmul.f32 %v242, %v244
        %s246 = sld [smem:[#allocation3 + $0x1]]
        %v247 = vstv %s246
        %v248 = vmul.f32 %v242, %v247
        %v250 = vrot.slane %v248, 1
        %v252 = vadd.f32 %v245, %v250
        %s253 = sld [smem:[#allocation3 + $0x2]]
        %v254 = vstv %s253
        %v255 = vmul.f32 %v242, %v254
        %v257 = vrot.slane %v255, 2
        %v259 = vadd.f32 %v252, %v257
        %s260 = sld [smem:[#allocation3 + $0x3]]
        %v261 = vstv %s260
        %v262 = vmul.f32 %v242, %v261
        %v264 = vrot.slane %v262, 3
        %v266 = vadd.f32 %v259, %v264
        %s267 = sld [smem:[#allocation2]]
        %v268 = vstv %s267
        %v269 = vadd.f32 %v266, %v268
        %v270 = vxor.u32 %v269, 2147483648
        %v271 = vmul.f32 %v270, 1.442695
        %v272 = vpow.pop %v271
        %v273 = vadd.f32 %v272, 1.0
        %v274 = vrcp.pop %v273
        %v275 = vmul.f32 1.0, %v274
        %276 = vst [vmem:[%s241] sm:$0x1] %v275
        %p277 = scmp.lt.s32.totalorder %s21, 1
        %s278 = scalar_select %p277, %s21, 1
        %p279 = scmp.lt.s32.totalorder %s22, 1
        %s280 = scalar_select %p279, %s22, 1
        %s281 = smul.addr %s278, 2
        %s282 = sadd.s32 %s280, %s281
        %s283 = scalar_lea.vmem %s4, %s282
        // Predicated region
        $region41: #{salhead_forward.1} parent=35 // pred_check
          %p284 = pneg %p140
        $region42: #{salhead_forward.1} parent=35 // pred_check_branch
          %286 = sbr.rel (%p284) target = $region44
        $region43: #{salhead_forward.1} parent=35 // pred_region
          _
        $region44: #{salhead_forward.1} parent=35 // pred_fallthru
          _
      $region36: #{salhead_forward.1} parent=5 // pred_fallthru
        _
      %p287 = scmp.le.s32.totalorder 2, %s12
      // Predicated region
      $region45: #{salhead_forward.1} parent=5 // pred_check
        %p288 = pneg %p287
      $region46: #{salhead_forward.1} parent=5 // pred_check_branch
        %290 = sbr.rel (%p288) target = $region48
      $region47: #{salhead_forward.1} parent=5 // pred_region
        %s291 = ssub.s32 %s12, 2
        // Predicated region
        $region49: #{salhead_forward.1} parent=47 // pred_check
          %p292 = pneg %p146
        $region50: #{salhead_forward.1} parent=47 // pred_check_branch
          %294 = sbr.rel (%p292) target = $region52
        $region51: #{salhead_forward.1} parent=47 // pred_region
          %p295 = scmp.lt.s32.totalorder %s23, 1
          %s296 = scalar_select %p295, %s23, 1
          %p297 = scmp.lt.s32.totalorder %s24, 1
          %s298 = scalar_select %p297, %s24, 1
          %s299 = smul.addr %s296, 2
          %s300 = sadd.s32 %s298, %s299
          %s301 = scalar_lea.vmem %s4, %s300
        $region52: #{salhead_forward.1} parent=47 // pred_fallthru
          _
      $region48: #{salhead_forward.1} parent=5 // pred_fallthru
        _
    $region6: #{salhead_forward.1} parent=1 // loop_footer
      %s16 = sadd.s32 1, %s12
    $region7: #{salhead_forward.1} parent=1 // loop_footer_branch
      %11 = sbr.rel target = $region3
    $region8: #{salhead_forward.1} parent=1 // loop_exit
      _
    %302 = vsyncpa [#allocation4], 1
    %s303 = scalar_lea.sflag [#allocation4], 1
    %304 = vsyncpa %s303, 1

</llo_original>
